<compile_context>
chip_gen: v6e
topology: v6e:2x2x1
jax: 0.10.0
libtpu: 0.0.40
codegen_flags: <defaults>
</compile_context>

<pallas_src>
import functools

import jax
import jax.numpy as jnp
from jax.experimental import pallas as pl
from jax.experimental.pallas import tpu as pltpu


def _round_up(n, m):
    return ((n + m - 1) // m) * m


# ------------------- per-channel activity (variance) kernel ------------------
def _var_kernel(x_ref, v_ref):
    # x_ref: (R, HW)  rows = flattened (b, c) pairs, lanes = spatial (dense).
    x = x_ref[...].astype(jnp.float32)
    n = x.shape[1]
    mean = jnp.sum(x, axis=1, keepdims=True) * (1.0 / n)        # (R, 1)
    d = x - mean
    # Unbiased variance; sqrt skipped (monotone, only used for top_k ranking).
    v_ref[...] = jnp.sum(d * d, axis=1, keepdims=True) * (1.0 / (n - 1))


def channel_variance(x_flat, *, row_tile=512):
    # x_flat: (B, C, HW) -> (B, C) unbiased variance over the spatial axis.
    B, C, HW = x_flat.shape
    BC = B * C
    x2d = x_flat.reshape(BC, HW)                    # metadata-only reshape
    R = min(row_tile, _round_up(BC, 8))             # large, sublane-aligned tile
    BCp = _round_up(BC, R)
    if BCp != BC:
        x2d = jnp.pad(x2d, ((0, BCp - BC), (0, 0)))  # padded rows -> var 0, sliced off
    var = pl.pallas_call(
        _var_kernel,
        out_shape=jax.ShapeDtypeStruct((BCp, 1), jnp.float32),
        grid=(BCp // R,),
        in_specs=[pl.BlockSpec((R, HW), lambda i: (i, 0))],
        out_specs=pl.BlockSpec((R, 1), lambda i: (i, 0)),
        compiler_params=pltpu.CompilerParams(dimension_semantics=("parallel",)),
    )(x2d)
    return var[:BC].reshape(B, C)


# --------- fused channel-gather + 3x3 conv + untouched-channel copy ----------
def _pconv_kernel(sel_ref, unsel_ref, x_hbm, w_ref, b_ref, mask_ref, o_ref,
                  gbuf, sems, *, C, P, O, CU, W, HW):
    # sel_ref:   (B, P)  int32 SMEM (scalar prefetch)  selected channel ids
    # unsel_ref: (B, CU) int32 SMEM (scalar prefetch)  unselected channel ids
    # x_hbm:     (B*C, HW) in HBM (memory_space=pl.ANY), gathered manually
    # w_ref:     (P, O, 9) f32 VMEM-resident across the grid
    # b_ref:     (O, 1)    f32 bias column
    # mask_ref:  (9, HW)   f32 precomputed zero-padding masks, one per tap
    # o_ref:     (1, O + CU, HW) output block for batch b (NCHW-flattened)
    # gbuf:      (C, HW)   VMEM scratch: rows [0,P) selected, [P,C) untouched
    # sems:      DMA semaphores, one per gathered channel
    b = pl.program_id(0)

    # Issue all gather DMAs (selected first: compute waits on those).
    copies = []
    for p in range(P):
        row = b * C + sel_ref[b, p]
        cp = pltpu.make_async_copy(x_hbm.at[row], gbuf.at[p], sems.at[p])
        cp.start()
        copies.append(cp)
    for j in range(CU):
        row = b * C + unsel_ref[b, j]
        cp = pltpu.make_async_copy(x_hbm.at[row], gbuf.at[P + j], sems.at[P + j])
        cp.start()
        copies.append(cp)

    # ---- 3x3 conv over the P selected channels (all in one step) ----
    for p in range(P):
        copies[p].wait()
    xall = gbuf[0:P, :].astype(jnp.float32)          # (P, HW), lane-dense
    wv = w_ref[...].astype(jnp.float32)              # (P, O, 9)
    mv = mask_ref[...]                               # (9, HW) f32
    bias = b_ref[...].astype(jnp.float32)            # (O, 1)
    acc = jnp.broadcast_to(bias, (O, HW))            # bias-seeded accumulator
    for t in range(9):
        dy, dx = t // 3 - 1, t % 3 - 1
        d = dy * W + dx                              # flat-index shift of this tap
        # rolled[p, f] = xall[p, (f + d) mod HW]  (XLU lane rotate)
        rolled = xall if d == 0 else pltpu.roll(xall, shift=(-d) % HW, axis=1)
        masked = rolled * mv[t:t + 1, :]             # precomputed boundary mask
        for p in range(P):
            acc = acc + wv[p, :, t:t + 1] * masked[p:p + 1, :]   # VPU FMA (O, HW)
    # TODO(synk): replace the broadcast-FMA loop with an MXU im2col matmul
    # ((O, 9*P) x (9*P, HW_tile)) when O grows large (>=64) on v6e/v7x.
    o_ref[0, 0:O, :] = acc.astype(o_ref.dtype)

    # ---- pass-through copy of the untouched channels ----
    for j in range(CU):
        copies[P + j].wait()
    if CU > 0:
        o_ref[0, O:O + CU, :] = gbuf[P:P + CU, :]


def pconv3x3_fused(x_flat, sel_idx, unsel_idx, weight, bias, H, W):
    # x_flat: (B, C, HW), sel_idx: (B, P) int32, unsel_idx: (B, C-P) int32,
    # weight: (O, P, 3, 3), bias: (O,)  ->  (B, O + C - P, HW) in x dtype.
    B, C, HW = x_flat.shape
    O, P = weight.shape[0], weight.shape[1]
    CU = C - P

    x2d = x_flat.reshape(B * C, HW)                  # metadata-only reshape
    # w_arr[p, o, ky*3+kx] = weight[o, p, ky, kx]
    w_arr = jnp.transpose(weight, (1, 0, 2, 3)).reshape(P, O, 9).astype(jnp.float32)
    b_col = bias.reshape(O, 1).astype(jnp.float32)

    # Precomputed zero-padding masks: mask[t, f] = 1 iff tap t of output pixel
    # f reads an in-bounds input pixel (replaces the per-tap compare/select
    # chain and the int32 coord table of the previous version).
    fidx = jnp.arange(HW, dtype=jnp.int32)
    fy, fx = fidx // W, fidx % W
    rows = []
    for t in range(9):
        dy, dx = t // 3 - 1, t % 3 - 1
        valid = (fy + dy >= 0) & (fy + dy < H) & (fx + dx >= 0) & (fx + dx < W)
        rows.append(valid.astype(jnp.float32))
    mask_tbl = jnp.stack(rows, axis=0)               # (9, HW)

    kernel = functools.partial(_pconv_kernel, C=C, P=P, O=O, CU=CU, W=W, HW=HW)
    return pl.pallas_call(
        kernel,
        out_shape=jax.ShapeDtypeStruct((B, O + CU, HW), x_flat.dtype),
        grid_spec=pltpu.PrefetchScalarGridSpec(
            num_scalar_prefetch=2,
            grid=(B,),
            in_specs=[
                pl.BlockSpec(memory_space=pl.ANY),                   # x rows in HBM
                pl.BlockSpec((P, O, 9), lambda b, s, u: (0, 0, 0)),  # weights, resident
                pl.BlockSpec((O, 1), lambda b, s, u: (0, 0)),        # bias, resident
                pl.BlockSpec((9, HW), lambda b, s, u: (0, 0)),       # masks, resident
            ],
            out_specs=pl.BlockSpec((1, O + CU, HW), lambda b, s, u: (b, 0, 0)),
            scratch_shapes=[
                pltpu.VMEM((C, HW), x_flat.dtype),       # gathered channel rows
                pltpu.SemaphoreType.DMA((C,)),           # one per gather DMA
            ],
        ),
        compiler_params=pltpu.CompilerParams(
            dimension_semantics=("parallel",)),
    )(sel_idx, unsel_idx, x2d, w_arr, b_col, mask_tbl)


# --------------------------------- forward -----------------------------------
def adaptive_pconv(x, weight, bias, partial_channels):
    B, C, H, W = x.shape
    P = partial_channels
    O = weight.shape[0]
    HW = H * W

    x_flat = x.reshape(B, C, HW)                     # metadata-only reshape
    var = channel_variance(x_flat)                   # (B, C), ranks like std
    _, top_idx = jax.lax.top_k(var, P)               # descending activity
    top_idx = top_idx.astype(jnp.int32)

    # Unselected channels in ascending original index (matches mask.nonzero()).
    # TODO(synk): this index bookkeeping stays in JAX glue (tiny scalar
    # metadata; no cheaper Pallas expression).
    ar = jnp.arange(C)
    sel_mask = jnp.any(jax.nn.one_hot(top_idx, C, dtype=jnp.bool_), axis=1)
    key = jnp.where(sel_mask, C + ar, ar)
    unsel_idx = jnp.argsort(key, axis=1)[:, : C - P].astype(jnp.int32)

    out_flat = pconv3x3_fused(x_flat, top_idx, unsel_idx, weight, bias, H, W)
    return out_flat.reshape(B, O + C - P, H, W)      # conv out + untouched, fused


# ---------------------------- plain-JAX reference ----------------------------
def reference(x, weight, bias, partial_channels):
    B, C, H, W = x.shape
    P = partial_channels
    std = jnp.std(x, axis=(2, 3), ddof=1)
    _, top_idx = jax.lax.top_k(std, P)
    x_sel = jnp.take_along_axis(x, top_idx[:, :, None, None], axis=1)
    conv_out = jax.lax.conv_general_dilated(
        x_sel, weight, window_strides=(1, 1), padding=((1, 1), (1, 1)),
        dimension_numbers=("NCHW", "OIHW", "NCHW"),
    ) + bias[None, :, None, None]
    ar = jnp.arange(C)
    sel_mask = jnp.any(jax.nn.one_hot(top_idx, C, dtype=jnp.bool_), axis=1)
    key = jnp.where(sel_mask, C + ar, ar)
    unsel_idx = jnp.argsort(key, axis=1)[:, : C - P]
    untouched = jnp.take_along_axis(x, unsel_idx[:, :, None, None], axis=1)
    return jnp.concatenate([conv_out, untouched], axis=1)


if __name__ == "__main__":
    B, C, H, W = 2, 8, 16, 16
    out_channels = 8
    partial_ratio = 0.25
    P = int(C * partial_ratio)  # = 2

    key = jax.random.PRNGKey(0)
    kx, kw, kb = jax.random.split(key, 3)
    x = jax.random.normal(kx, (B, C, H, W), jnp.float32)
    weight = jax.random.normal(kw, (out_channels, P, 3, 3), jnp.float32) * 0.1
    bias = jax.random.normal(kb, (out_channels,), jnp.float32) * 0.1

    out = adaptive_pconv(x, weight, bias, P)
    out = jax.block_until_ready(out)

    assert out.shape == (B, out_channels + C - P, H, W), out.shape
    ref = jax.block_until_ready(reference(x, weight, bias, P))
    assert jnp.allclose(out, ref, atol=5e-3, rtol=5e-3), float(jnp.max(jnp.abs(out - ref)))

    print("KERNEL_OK")
</pallas_src>

<mosaic_0001>
module attributes {stable_mosaic.version = 11 : i64} {
  func.func @_var_kernel(%arg0: i32, %arg1: memref<16x256xf32, #tpu.memory_space<vmem>>, %arg2: memref<16x1xf32, #tpu.memory_space<vmem>>) attributes {dimension_semantics = [#tpu.dimension_semantics<parallel>], iteration_bounds = array<i64: 1>, scalar_prefetch = 0 : i64, scratch_operands = 0 : i64, tpu.core_type = #tpu.core_type<tc>, window_params = [{transform_indices = @transform_0, window_bounds = array<i64: 16, 256>}, {transform_indices = @transform_1, window_bounds = array<i64: 16, 1>}]} {
    %c0 = arith.constant 0 : index
    %c0_0 = arith.constant 0 : index
    %0 = vector.load %arg1[%c0, %c0_0] : memref<16x256xf32, #tpu.memory_space<vmem>>, vector<16x256xf32>
    %cst = arith.constant dense<0.000000e+00> : vector<16xf32>
    %1 = vector.multi_reduction <add>, %0, %cst [1] : vector<16x256xf32> to vector<16xf32>
    %2 = vector.shape_cast %1 : vector<16xf32> to vector<16x1xf32>
    %cst_1 = arith.constant 3.906250e-03 : f32
    %3 = vector.broadcast %cst_1 : f32 to vector<16x1xf32>
    %4 = arith.mulf %2, %3 : vector<16x1xf32>
    %5 = vector.broadcast %4 : vector<16x1xf32> to vector<16x256xf32>
    %6 = arith.subf %0, %5 : vector<16x256xf32>
    %7 = arith.mulf %6, %6 : vector<16x256xf32>
    %cst_2 = arith.constant dense<0.000000e+00> : vector<16xf32>
    %8 = vector.multi_reduction <add>, %7, %cst_2 [1] : vector<16x256xf32> to vector<16xf32>
    %9 = vector.shape_cast %8 : vector<16xf32> to vector<16x1xf32>
    %cst_3 = arith.constant 0.00392156886 : f32
    %10 = vector.broadcast %cst_3 : f32 to vector<16x1xf32>
    %11 = arith.mulf %9, %10 : vector<16x1xf32>
    %c0_4 = arith.constant 0 : index
    %c0_5 = arith.constant 0 : index
    %12 = vector.load %arg2[%c0_4, %c0_5] : memref<16x1xf32, #tpu.memory_space<vmem>>, vector<16x1xf32>
    tpu.vector_store %arg2[%c0_4, %c0_5], %11 {strides = array<i32>} : memref<16x1xf32, #tpu.memory_space<vmem>>, vector<16x1xf32>,
    return
  }
  func.func @transform_0(%arg0: i32) -> (i32, i32) {
    %c0_i32 = arith.constant 0 : i32
    %c0_i32_0 = arith.constant 0 : i32
    return %arg0, %c0_i32 : i32, i32
  }
  func.func @transform_1(%arg0: i32) -> (i32, i32) {
    %c0_i32 = arith.constant 0 : i32
    %c0_i32_0 = arith.constant 0 : i32
    return %arg0, %c0_i32 : i32, i32
  }
}

</mosaic_0001>

<llo_original>
// kernel: tpu_custom_call.1
$region0: #{tpu_custom_call.1}
  #allocation0 [shape = 'u32[]', space=smem, size = 0x4, offset = 0x4, fixed_abs, tag = 'smem constant byte address 0x4 - core index']
  #allocation1 [shape = 'u32[144,128]{1,0:T(1,128)}', space=vmem, size = 0x12000, scoped, tag = 'internal scratch']
  %s0 = inlined_call_operand.hbm [shape: f32[16,256], index: 0, kind: input, shape index: {}]
  %s1 = inlined_call_operand.vmem [shape: f32[16,1], index: 1, kind: output, shape index: {}]
  %s2 = sld [smem:[#allocation0]]
  $region18: #{tpu_custom_call.1} parent=0
    _
  %s4 = ssub.s32 1, %s2
  %s5 = scalar_select 0, %s4, %s2
  $region1: #{tpu_custom_call.1} parent=0
    #allocation2 [shape = 'u8[16384]{0}', space=vmem, size = 0x4000, scoped, tag = 'input window, operand 0, single buffered']
    #allocation3 [shape = 's32[1]{0}', space=sflag, size = 0x4, scoped, tag = 'scoped memory for tpu_custom_call.1']
    %6 = vsyncpa [#allocation3], 0
    // Predicated region
    $region2: #{tpu_custom_call.1} parent=1 // pred_check
      _
    $region3: #{tpu_custom_call.1} parent=1 // pred_check_branch
      %8 = sbr.rel (0) target = $region5
    $region4: #{tpu_custom_call.1} parent=1 // pred_region
      %s10 = ssub.s32 512, 512
      %11 = vsyncadd [#allocation3], %s10
      %s12 = sshll.u32 [#allocation2], 4
      %s13 = int_to_ptr.vmem [resolvable:$true] %s12
      %18 = dma.hbm_to_vmem [thread:$0]  %s0, 512, %s13, [#allocation3], 256, 256, 16
    $region5: #{tpu_custom_call.1} parent=1 // pred_fallthru
      _
    // Predicated region
    $region6: #{tpu_custom_call.1} parent=1 // pred_check
      _
    $region7: #{tpu_custom_call.1} parent=1 // pred_check_branch
      %20 = sbr.rel (0) target = $region9
    $region8: #{tpu_custom_call.1} parent=1 // pred_region
      %21 = dma.done [#allocation3], 512
    $region9: #{tpu_custom_call.1} parent=1 // pred_fallthru
      _
    %v22 = vld [vmem:[#allocation2] sm:$0xff]
    %v23 = vld [vmem:[#allocation2 + $0x8] sm:$0xff]
    %v24 = vld [vmem:[#allocation2 + $0x10] sm:$0xff]
    %v25 = vld [vmem:[#allocation2 + $0x18] sm:$0xff]
    %v26 = vadd.f32 %v22, %v23
    %27 = vadd.xlane.f32.xlu0 %v26
    %v28 = vpop.xlane.xlu0 %27
    %v29 = vadd.f32 %v24, %v25
    %30 = vadd.xlane.f32.xlu0 %v29
    %v31 = vpop.xlane.xlu0 %30
    %v32 = vmul.f32 %v28, 0.00390625
    %v33 = vmul.f32 %v31, 0.00390625
    %v34 = vsub.f32 %v22, %v32
    %v35 = vsub.f32 %v23, %v32
    %v36 = vsub.f32 %v24, %v33
    %v37 = vsub.f32 %v25, %v33
    %v38 = vmul.f32 %v34, %v34
    %v39 = vmul.f32 %v35, %v35
    %v40 = vmul.f32 %v36, %v36
    %v41 = vmul.f32 %v37, %v37
    %v42 = vadd.f32 %v38, %v39
    %43 = vadd.xlane.f32.xlu0 %v42
    %v44 = vpop.xlane.xlu0 %43
    %v45 = vadd.f32 %v40, %v41
    %46 = vadd.xlane.f32.xlu0 %v45
    %v47 = vpop.xlane.xlu0 %46
    %v48 = vmul.f32 %v44, 0.003921569
    %v49 = vmul.f32 %v47, 0.003921569
    %vm50 = vcmask 7168
    %51 = vst.msk [vmem:[%s1] sm:$0xff] %vm50, %v48
    %52 = vst.msk [vmem:[%s1 + $0x8] sm:$0xff] %vm50, %v49
    // Predicated region
    $region10: #{tpu_custom_call.1} parent=1 // pred_check
      _
    $region11: #{tpu_custom_call.1} parent=1 // pred_check_branch
      %54 = sbr.rel (0) target = $region13
    $region12: #{tpu_custom_call.1} parent=1 // pred_region
      _
    $region13: #{tpu_custom_call.1} parent=1 // pred_fallthru
      _
    // Predicated region
    $region14: #{tpu_custom_call.1} parent=1 // pred_check
      _
    $region15: #{tpu_custom_call.1} parent=1 // pred_check_branch
      %56 = sbr.rel (0) target = $region17
    $region16: #{tpu_custom_call.1} parent=1 // pred_region
      _
    $region17: #{tpu_custom_call.1} parent=1 // pred_fallthru
      _
    %57 = vsyncpa [#allocation3], 1

</llo_original>
